<compile_context>
chip_gen: v6e
topology: v6e:2x2x1
jax: 0.10.0
libtpu: 0.0.40
codegen_flags: <defaults>
</compile_context>

<pallas_src>
import functools
import math

import jax
import jax.numpy as jnp
from jax import lax
from jax.experimental import pallas as pl
from jax.experimental.pallas import tpu as pltpu

MASK_VALUE = -1e30                       # large finite negative -> NaN-safe masking
VMEM_LIMIT_BYTES = 56 * 1024 * 1024      # v7x-safe (64 MiB/TC); raise toward ~100 MiB on v5e/v6e


# --------------------------- Kernel A: fused QKV projection ---------------------------
def qkv_proj_kernel(x_ref, wqkv_ref, q_ref, k_ref, v_ref):
    # x_ref: (1, tm, d_in) bf16; wqkv_ref: (d_in, 3*d_out) bf16 (Q columns pre-scaled).
    qkv = jnp.dot(x_ref[0], wqkv_ref[...], preferred_element_type=jnp.float32)  # (tm, 3*d_out) f32
    d_out = q_ref.shape[-1]
    q_ref[0] = qkv[:, :d_out].astype(q_ref.dtype)
    k_ref[0] = qkv[:, d_out:2 * d_out].astype(k_ref.dtype)
    v_ref[0] = qkv[:, 2 * d_out:].astype(v_ref.dtype)


# ---------------- Kernel B: causal flash attention + fused output projection ----------------
def flash_attn_kernel(q_ref, k_ref, v_ref, wo_ref, bo_ref, o_ref,
                      m_ref, l_ref, acc_ref, *, num_heads, block_q, block_kv):
    # q_ref: (1, bq, d_out) bf16 ; k_ref/v_ref: (1, bk, d_out) bf16
    # wo_ref: (H, hd, d_out) bf16 ; bo_ref: (1, d_out) f32 ; o_ref: (1, bq, d_out)
    # scratch: m_ref/l_ref (H, bq, 1) f32 ; acc_ref (H, bq, hd) f32
    qi = pl.program_id(1)
    kv = pl.program_id(2)
    hd = acc_ref.shape[-1]

    @pl.when(kv == 0)
    def _init():
        m_ref[...] = jnp.full(m_ref.shape, MASK_VALUE, jnp.float32)
        l_ref[...] = jnp.zeros(l_ref.shape, jnp.float32)
        acc_ref[...] = jnp.zeros(acc_ref.shape, jnp.float32)

    q_start = qi * block_q
    k_start = kv * block_kv
    tile_contributes = k_start < q_start + block_q                # not entirely above the diagonal
    tile_needs_mask = (k_start + block_kv - 1) > q_start          # tile crosses the diagonal

    def accumulate(apply_mask):
        q = q_ref[0]                                              # (bq, d_out) bf16
        k = k_ref[0]                                              # (bk, d_out) bf16
        v = v_ref[0]
        if apply_mask:
            row = q_start + lax.broadcasted_iota(jnp.int32, (block_q, block_kv), 0)
            col = k_start + lax.broadcasted_iota(jnp.int32, (block_q, block_kv), 1)
            causal = col > row                                    # triu(diagonal=1)
        for h in range(num_heads):                                # static unroll; heads = lane slices
            lo = h * hd
            qh = q[:, lo:lo + hd]
            kh = k[:, lo:lo + hd]
            vh = v[:, lo:lo + hd]
            # q @ k^T without an explicit transpose (trans_b matmul on the MXU), f32 accumulation.
            s = lax.dot_general(qh, kh, (((1,), (1,)), ((), ())),
                                preferred_element_type=jnp.float32)        # (bq, bk) f32
            if apply_mask:
                s = jnp.where(causal, MASK_VALUE, s)
            m_prev = m_ref[h]                                              # (bq, 1)
            m_new = jnp.maximum(m_prev, jnp.max(s, axis=-1, keepdims=True))
            alpha = jnp.exp(m_prev - m_new)
            p = jnp.exp(s - m_new)                                         # f32 stats
            l_ref[h] = alpha * l_ref[h] + jnp.sum(p, axis=-1, keepdims=True)
            acc_ref[h] = alpha * acc_ref[h] + jnp.dot(
                p.astype(v.dtype), vh, preferred_element_type=jnp.float32)
            m_ref[h] = m_new

    @pl.when(jnp.logical_and(tile_contributes, jnp.logical_not(tile_needs_mask)))
    def _below_diag():
        accumulate(apply_mask=False)      # fully unmasked tile: no iota / select work

    @pl.when(jnp.logical_and(tile_contributes, tile_needs_mask))
    def _on_diag():
        accumulate(apply_mask=True)       # diagonal-crossing tile only

    @pl.when(kv == pl.num_programs(2) - 1)
    def _finalize():
        # Exact normalization (no approx reciprocal) + fused output projection + bias.
        out = bo_ref[...].astype(jnp.float32)                              # (1, d_out) -> broadcast
        for h in range(num_heads):
            ctx_h = acc_ref[h] / l_ref[h]                                  # (bq, hd) f32
            out = out + jnp.dot(ctx_h.astype(wo_ref.dtype), wo_ref[h],
                                preferred_element_type=jnp.float32)        # (bq, d_out)
        o_ref[0] = out.astype(o_ref.dtype)


# --------------------------------------- Wrapper ---------------------------------------
def multi_head_attention(x, params, num_heads, *, block_q=256, block_kv=256):
    """Forward pass of the PyTorch MultiHeadAttention module (eval mode).

    x: (B, T, d_in) float32.
    params:
      wqkv : (d_in, 3*d_out) fused, pre-transposed [Q|K|V] weight; Q columns pre-scaled by
             1/sqrt(head_dim).
      wo_h : (num_heads, head_dim, d_out) out_proj weight as per-head slabs (= wo.T reshaped).
      bo   : (1, d_out) out_proj bias.
    """
    B, T, d_in = x.shape
    wo_h = params["wo_h"]
    d_out = wo_h.shape[-1]
    hd = d_out // num_heads
    assert d_out % num_heads == 0, "d_out must be divisible by num_heads"
    assert params["wqkv"].shape == (d_in, 3 * d_out)

    block_q = min(block_q, T)
    block_kv = min(block_kv, T)
    if T % block_q:
        block_q = T
    if T % block_kv:
        block_kv = T
    num_q, num_kv = T // block_q, T // block_kv

    # bf16 MXU operands, f32 accumulation.
    x_bf = x.astype(jnp.bfloat16)
    wqkv_bf = params["wqkv"].astype(jnp.bfloat16)
    wo_bf = wo_h.astype(jnp.bfloat16)
    bo = params["bo"].astype(jnp.float32)

    # ---- pass 1: fused QKV projection ----
    qkv_cost = pl.CostEstimate(
        flops=2 * B * T * d_in * 3 * d_out,
        transcendentals=0,
        bytes_accessed=2 * (B * T * d_in + d_in * 3 * d_out + 3 * B * T * d_out))
    q, k, v = pl.pallas_call(
        qkv_proj_kernel,
        out_shape=[jax.ShapeDtypeStruct((B, T, d_out), jnp.bfloat16)] * 3,
        grid_spec=pltpu.PrefetchScalarGridSpec(
            num_scalar_prefetch=0,
            grid=(B, num_q),
            in_specs=[
                pl.BlockSpec((1, block_q, d_in), lambda b, i: (b, i, 0)),
                # constant index_map -> weight stays resident, not re-fetched per grid step
                pl.BlockSpec((d_in, 3 * d_out), lambda b, i: (0, 0)),
            ],
            out_specs=[pl.BlockSpec((1, block_q, d_out), lambda b, i: (b, i, 0))] * 3,
        ),
        compiler_params=pltpu.CompilerParams(
            dimension_semantics=("parallel", "parallel"),
            vmem_limit_bytes=VMEM_LIMIT_BYTES),
        cost_estimate=qkv_cost,
    )(x_bf, wqkv_bf)

    # ---- pass 2: causal flash attention + fused output projection ----
    def q_map(b, qi, kv):
        return (b, qi, 0)

    def kv_map(b, qi, kv):
        # Clamp fully-masked kv tiles to the last useful block: identical consecutive block
        # indices -> Pallas skips the DMA for the skipped iterations.
        last_useful = ((qi + 1) * block_q - 1) // block_kv
        return (b, jnp.minimum(kv, last_useful), 0)

    attn_cost = pl.CostEstimate(
        flops=2 * B * T * T * d_out + 2 * B * T * d_out * d_out,          # ~causal-halved + out-proj
        transcendentals=B * num_heads * T * T // 2,
        bytes_accessed=(B * T * d_out * 2                                 # q (bf16), read once
                        + 2 * B * T * d_out * 2 * max(1, (num_q + 1) // 2)  # k, v (causal-clamped)
                        + B * T * d_out * 4                               # output (f32)
                        + d_out * d_out * 2 + d_out * 4))                 # weights / bias (advisory)

    kernel = functools.partial(flash_attn_kernel, num_heads=num_heads,
                               block_q=block_q, block_kv=block_kv)
    return pl.pallas_call(
        kernel,
        out_shape=jax.ShapeDtypeStruct((B, T, d_out), x.dtype),
        grid_spec=pltpu.PrefetchScalarGridSpec(
            num_scalar_prefetch=0,
            grid=(B, num_q, num_kv),
            in_specs=[
                pl.BlockSpec((1, block_q, d_out), q_map),
                pl.BlockSpec((1, block_kv, d_out), kv_map),
                pl.BlockSpec((1, block_kv, d_out), kv_map),
                pl.BlockSpec((num_heads, hd, d_out), lambda b, qi, kv: (0, 0, 0)),
                pl.BlockSpec((1, d_out), lambda b, qi, kv: (0, 0)),
            ],
            out_specs=pl.BlockSpec((1, block_q, d_out), q_map),
            scratch_shapes=[
                pltpu.VMEM((num_heads, block_q, 1), jnp.float32),    # running row-max m
                pltpu.VMEM((num_heads, block_q, 1), jnp.float32),    # running row-sum l
                pltpu.VMEM((num_heads, block_q, hd), jnp.float32),   # context accumulator
            ],
        ),
        compiler_params=pltpu.CompilerParams(
            dimension_semantics=("parallel", "parallel", "arbitrary"),
            vmem_limit_bytes=VMEM_LIMIT_BYTES),
        cost_estimate=attn_cost,
    )(q, k, v, wo_bf, bo)


# --------------------------------------- Reference ---------------------------------------
def _reference(x, wq, wk, wv, wo, bo, num_heads):
    # pure-JAX f32 replica of the PyTorch forward (dropout = identity)
    B, T, _ = x.shape
    d_out = wo.shape[0]
    hd = d_out // num_heads
    q = x @ wq.T
    k = x @ wk.T
    v = x @ wv.T
    q = q.reshape(B, T, num_heads, hd).transpose(0, 2, 1, 3)
    k = k.reshape(B, T, num_heads, hd).transpose(0, 2, 1, 3)
    v = v.reshape(B, T, num_heads, hd).transpose(0, 2, 1, 3)
    s = jnp.einsum("bhtd,bhsd->bhts", q, k)
    mask = jnp.triu(jnp.ones((T, T), bool), k=1)
    s = jnp.where(mask, -jnp.inf, s)
    a = jax.nn.softmax(s / math.sqrt(hd), axis=-1)
    ctx = jnp.einsum("bhts,bhsd->bhtd", a, v).transpose(0, 2, 1, 3).reshape(B, T, d_out)
    return ctx @ wo.T + bo


if __name__ == "__main__":
    # Small but TPU-layout-friendly shapes: d multiple of 128 (lane-dense stores),
    # T = 256 with 128-row tiles so the causal flash grid (2 q-tiles x 2 kv-tiles) is exercised.
    d_in = d_out = 128
    num_heads = 4
    head_dim = d_out // num_heads
    B, T = 2, 256
    block = 128

    key = jax.random.PRNGKey(0)
    ks = jax.random.split(key, 6)
    init = lambda kk, shape: (0.02 * jax.random.normal(kk, shape)).astype(jnp.float32)

    # PyTorch nn.Linear convention: W is (out_features, in_features), y = x @ W.T (+ b)
    wq = init(ks[0], (d_out, d_in))
    wk = init(ks[1], (d_out, d_in))
    wv = init(ks[2], (d_out, d_in))
    wo = init(ks[3], (d_out, d_out))
    bo = init(ks[4], (d_out,))
    x = jax.random.normal(ks[5], (B, T, d_in), jnp.float32)

    # Wrapper-side layout prep (free at parameter-load time):
    #   * fuse Q|K|V, pre-transpose to (in, out), fold 1/sqrt(head_dim) into the Q columns
    #   * out_proj weight as per-head (head_dim, d_out) slabs -> no ctx relayout in-kernel
    wq_scaled = wq / math.sqrt(head_dim)
    params = {
        "wqkv": jnp.concatenate([wq_scaled, wk, wv], axis=0).T,   # (d_in, 3*d_out)
        "wo_h": wo.T.reshape(num_heads, head_dim, d_out),         # (H, hd, d_out)
        "bo": bo.reshape(1, d_out),
    }

    out = multi_head_attention(x, params, num_heads, block_q=block, block_kv=block)
    out = jax.block_until_ready(out)

    ref = _reference(x, wq, wk, wv, wo, bo.reshape(1, d_out), num_heads)
    assert out.shape == (B, T, d_out)
    # bf16 MXU operands with f32 accumulation -> bf16-level parity vs the f32 reference
    assert jnp.allclose(out, ref, atol=1e-2, rtol=1e-2), (
        f"mismatch vs reference: max abs err = {jnp.max(jnp.abs(out - ref))}")
    print("KERNEL_OK")
</pallas_src>

<mosaic_0001>
module attributes {stable_mosaic.version = 11 : i64} {
  func.func @qkv_proj_kernel(%arg0: i32, %arg1: i32, %arg2: memref<1x128x128xbf16, #tpu.memory_space<vmem>>, %arg3: memref<128x384xbf16, #tpu.memory_space<vmem>>, %arg4: memref<1x128x128xbf16, #tpu.memory_space<vmem>>, %arg5: memref<1x128x128xbf16, #tpu.memory_space<vmem>>, %arg6: memref<1x128x128xbf16, #tpu.memory_space<vmem>>) attributes {dimension_semantics = [#tpu.dimension_semantics<parallel>, #tpu.dimension_semantics<parallel>], iteration_bounds = array<i64: 2, 2>, scalar_prefetch = 0 : i64, scratch_operands = 0 : i64, tpu.core_type = #tpu.core_type<tc>, window_params = [{transform_indices = @transform_0, window_bounds = array<i64: 1, 128, 128>}, {pipeline_mode = #tpu.pipeline_mode<synchronous>, transform_indices = @transform_1, window_bounds = array<i64: 128, 384>}, {transform_indices = @transform_2, window_bounds = array<i64: 1, 128, 128>}, {transform_indices = @transform_3, window_bounds = array<i64: 1, 128, 128>}, {transform_indices = @transform_4, window_bounds = array<i64: 1, 128, 128>}]} {
    %c0 = arith.constant 0 : index
    %c0_0 = arith.constant 0 : index
    %c0_1 = arith.constant 0 : index
    %0 = vector.load %arg2[%c0, %c0_0, %c0_1] : memref<1x128x128xbf16, #tpu.memory_space<vmem>>, vector<1x128x128xbf16>
    %1 = vector.shape_cast %0 : vector<1x128x128xbf16> to vector<128x128xbf16>
    %c0_2 = arith.constant 0 : index
    %c0_3 = arith.constant 0 : index
    %2 = vector.load %arg3[%c0_2, %c0_3] : memref<128x384xbf16, #tpu.memory_space<vmem>>, vector<128x384xbf16>
    %cst = arith.constant dense<0.000000e+00> : vector<128x384xf32>
    %3 = tpu.matmul %1, %2, %cst {dimension_numbers = #tpu.dot_dimension_numbers<[1], [0], [0], [1], [0, 0, 1, 1], [], []>} : vector<128x128xbf16>, vector<128x384xbf16>, vector<128x384xf32> -> vector<128x384xf32>
    %4 = vector.extract_strided_slice %3 {offsets = [0, 0], sizes = [128, 128], strides = [1, 1]} : vector<128x384xf32> to vector<128x128xf32>
    %5 = arith.truncf %4 : vector<128x128xf32> to vector<128x128xbf16>
    %c0_4 = arith.constant 0 : index
    %c0_5 = arith.constant 0 : index
    %c0_6 = arith.constant 0 : index
    %6 = vector.load %arg4[%c0_4, %c0_5, %c0_6] : memref<1x128x128xbf16, #tpu.memory_space<vmem>>, vector<1x128x128xbf16>
    %7 = vector.shape_cast %6 : vector<1x128x128xbf16> to vector<128x128xbf16>
    %8 = vector.shape_cast %5 : vector<128x128xbf16> to vector<1x128x128xbf16>
    tpu.vector_store %arg4[%c0_4, %c0_5, %c0_6], %8 {strides = array<i32>} : memref<1x128x128xbf16, #tpu.memory_space<vmem>>, vector<1x128x128xbf16>,
    %9 = vector.extract_strided_slice %3 {offsets = [0, 128], sizes = [128, 128], strides = [1, 1]} : vector<128x384xf32> to vector<128x128xf32>
    %10 = arith.truncf %9 : vector<128x128xf32> to vector<128x128xbf16>
    %c0_7 = arith.constant 0 : index
    %c0_8 = arith.constant 0 : index
    %c0_9 = arith.constant 0 : index
    %11 = vector.load %arg5[%c0_7, %c0_8, %c0_9] : memref<1x128x128xbf16, #tpu.memory_space<vmem>>, vector<1x128x128xbf16>
    %12 = vector.shape_cast %11 : vector<1x128x128xbf16> to vector<128x128xbf16>
    %13 = vector.shape_cast %10 : vector<128x128xbf16> to vector<1x128x128xbf16>
    tpu.vector_store %arg5[%c0_7, %c0_8, %c0_9], %13 {strides = array<i32>} : memref<1x128x128xbf16, #tpu.memory_space<vmem>>, vector<1x128x128xbf16>,
    %14 = vector.extract_strided_slice %3 {offsets = [0, 256], sizes = [128, 128], strides = [1, 1]} : vector<128x384xf32> to vector<128x128xf32>
    %15 = arith.truncf %14 : vector<128x128xf32> to vector<128x128xbf16>
    %c0_10 = arith.constant 0 : index
    %c0_11 = arith.constant 0 : index
    %c0_12 = arith.constant 0 : index
    %16 = vector.load %arg6[%c0_10, %c0_11, %c0_12] : memref<1x128x128xbf16, #tpu.memory_space<vmem>>, vector<1x128x128xbf16>
    %17 = vector.shape_cast %16 : vector<1x128x128xbf16> to vector<128x128xbf16>
    %18 = vector.shape_cast %15 : vector<128x128xbf16> to vector<1x128x128xbf16>
    tpu.vector_store %arg6[%c0_10, %c0_11, %c0_12], %18 {strides = array<i32>} : memref<1x128x128xbf16, #tpu.memory_space<vmem>>, vector<1x128x128xbf16>,
    return
  }
  func.func @transform_0(%arg0: i32, %arg1: i32) -> (i32, i32, i32) {
    %c0_i32 = arith.constant 0 : i32
    %c0_i32_0 = arith.constant 0 : i32
    return %arg0, %arg1, %c0_i32 : i32, i32, i32
  }
  func.func @transform_1(%arg0: i32, %arg1: i32) -> (i32, i32) {
    %c0_i32 = arith.constant 0 : i32
    %c0_i32_0 = arith.constant 0 : i32
    %c0_i32_1 = arith.constant 0 : i32
    return %c0_i32, %c0_i32_0 : i32, i32
  }
  func.func @transform_2(%arg0: i32, %arg1: i32) -> (i32, i32, i32) {
    %c0_i32 = arith.constant 0 : i32
    %c0_i32_0 = arith.constant 0 : i32
    return %arg0, %arg1, %c0_i32 : i32, i32, i32
  }
  func.func @transform_3(%arg0: i32, %arg1: i32) -> (i32, i32, i32) {
    %c0_i32 = arith.constant 0 : i32
    %c0_i32_0 = arith.constant 0 : i32
    return %arg0, %arg1, %c0_i32 : i32, i32, i32
  }
  func.func @transform_4(%arg0: i32, %arg1: i32) -> (i32, i32, i32) {
    %c0_i32 = arith.constant 0 : i32
    %c0_i32_0 = arith.constant 0 : i32
    return %arg0, %arg1, %c0_i32 : i32, i32, i32
  }
}

</mosaic_0001>

<llo_original>
// kernel: tpu_custom_call.1
$region0: #{tpu_custom_call.1}
  #allocation0 [shape = 'u32[]', space=smem, size = 0x4, offset = 0x4, fixed_abs, tag = 'smem constant byte address 0x4 - core index']
  #allocation1 [shape = 'u32[144,128]{1,0:T(1,128)}', space=vmem, size = 0x12000, scoped, tag = 'internal scratch']
  %s0 = inlined_call_operand.hbm [shape: bf16[2,256,128], index: 0, kind: input, shape index: {}]
  %s1 = inlined_call_operand.hbm [shape: bf16[128,384], index: 1, kind: input, shape index: {}]
  %s2 = inlined_call_operand.hbm [shape: bf16[2,256,128], index: 2, kind: output, shape index: {0}]
  %s3 = inlined_call_operand.hbm [shape: bf16[2,256,128], index: 3, kind: output, shape index: {1}]
  %s4 = inlined_call_operand.hbm [shape: bf16[2,256,128], index: 4, kind: output, shape index: {2}]
  %5 = xla_tuple %s2, %s3, %s4
  %s6 = sld [smem:[#allocation0]]
  $region65: #{tpu_custom_call.1} parent=0
    _
  %s8 = ssub.s32 1, %s6
  %s9 = scalar_select 0, %s8, %s6
  $region1: #{tpu_custom_call.1} parent=0
    #allocation2 [shape = 'u8[65536]{0}', space=vmem, size = 0x10000, scoped, tag = 'input window, operand 0']
    #allocation3 [shape = 's32[2]{0}', space=sflag, size = 0x8, scoped, tag = 'scoped memory for tpu_custom_call.1']
    #allocation4 [shape = 's32[2]{0}', space=sflag, size = 0x8, scoped, tag = 'scoped memory for tpu_custom_call.1']
    #allocation5 [shape = 'u8[98304]{0}', space=vmem, size = 0x18000, scoped, tag = 'input window, operand 1, single buffered']
    #allocation6 [shape = 's32[1]{0}', space=sflag, size = 0x4, scoped, tag = 'scoped memory for tpu_custom_call.1']
    #allocation7 [shape = 'u8[65536]{0}', space=vmem, size = 0x10000, scoped, tag = 'output window, operand 0']
    #allocation8 [shape = 'u8[65536]{0}', space=vmem, size = 0x10000, scoped, tag = 'output window, operand 1']
    #allocation9 [shape = 's32[2]{0}', space=sflag, size = 0x8, scoped, tag = 'scoped memory for tpu_custom_call.1']
    #allocation10 [shape = 'u8[65536]{0}', space=vmem, size = 0x10000, scoped, tag = 'output window, operand 2']
    %10 = vsyncpa [#allocation3], 0
    %s11 = scalar_lea.sflag [#allocation3], 1
    %12 = vsyncpa %s11, 0
    %13 = vsyncpa [#allocation6], 0
    %14 = vsyncpa [#allocation4], 0
    %s15 = scalar_lea.sflag [#allocation4], 1
    %16 = vsyncpa %s15, 0
    %17 = vsyncpa [#allocation9], 0
    %s18 = scalar_lea.sflag [#allocation9], 1
    %19 = vsyncpa %s18, 0
    loop: start=0, step=1, limit=6
    $region2: #{tpu_custom_call.1} parent=1 // loop_pre_header
      _
    $region3: #{tpu_custom_call.1} parent=1 // loop_header
      %s21 = sphi 0, %s25
      %p22 = scmp.ge.s32.totalorder %s21, 6
      %s28 = sphi 0, %s40
      %s29 = sphi 0, %s36
      %s30 = sphi 0, %s28
      %s31 = sphi 0, %s29
      %s32 = sphi 0, %s30
      %s33 = sphi 0, %s31
      %s45 = sphi 0, %s47
      %s48 = sphi 0, %s45
      %s49 = sphi 0, %s48
      %s65 = sphi 0, %s49
      %s69 = sphi 0, %s69
      %s71 = sphi 0, %s69
      %s72 = sphi 0, %s71
      %s86 = sphi 0, %s72
      %s94 = sphi 0, %s96
      %s97 = sphi 0, %s94
      %s98 = sphi 0, %s97
      %s114 = sphi 0, %s98
      %s122 = sphi 0, %s124
      %s125 = sphi 0, %s122
      %s126 = sphi 0, %s125
      %s142 = sphi 0, %s126
      %s150 = sphi 0, %s152
      %s153 = sphi 0, %s150
      %s154 = sphi 0, %s153
      %s170 = sphi 0, %s154
    $region4: #{tpu_custom_call.1} parent=1 // loop_header_branch
      %24 = sbr.rel (%p22) target = $region8
    $region5: #{tpu_custom_call.1} parent=1 // loop_body
      %s26 = ssub.s32 %s21, 1
      %s27 = ssub.s32 %s21, 2
      %s34 = sadd.s32 1, %s29
      %p35 = scmp.ge.s32.totalorder %s34, 2
      %s36 = scalar_select %p35, 0, %s34
      %s37 = sadd.s32 1, %s28
      %s38 = scalar_select %p35, %s37, %s28
      %p39 = scmp.ge.s32.totalorder %s38, 2
      %s40 = scalar_select %p39, 0, %s38
      %s41 = ssub.s32 %s28, %s40
      %s42 = ssub.s32 %s29, %s36
      %s43 = sor.u32 %s41, %s42
      %p44 = scmp.eq.s32.totalorder %s43, 0
      %s46 = sadd.s32 %s45, 1
      %s47 = scalar_select %p44, %s45, %s46
      %p50 = pneg %p44
      %p51 = scmp.eq.s32.totalorder %s21, 3
      %p52 = por %p50, %p51
      %p53 = scmp.ne.s32.totalorder %s45, %s48
      %p54 = scmp.eq.s32.totalorder %s21, 0
      %p55 = por %p53, %p54
      %p56 = scmp.ne.s32.totalorder %s45, %s48
      %p57 = scmp.eq.s32.totalorder %s26, 3
      %p58 = por %p56, %p57
      %p59 = scmp.ne.s32.totalorder %s48, %s49
      %p60 = scmp.eq.s32.totalorder %s26, 0
      %p61 = por %p59, %p60
      %p62 = scmp.ne.s32.totalorder %s48, %s49
      %p63 = scmp.eq.s32.totalorder %s27, 3
      %p64 = por %p62, %p63
      %p66 = scmp.ne.s32.totalorder %s49, %s65
      %p67 = scmp.eq.s32.totalorder %s27, 0
      %p68 = por %p66, %p67
      %s70 = sadd.s32 %s69, 1
      %p73 = scmp.eq.s32.totalorder %s21, 3
      %p74 = scmp.ne.s32.totalorder %s69, %s71
      %p75 = scmp.eq.s32.totalorder %s21, 0
      %p76 = por %p74, %p75
      %p77 = scmp.ne.s32.totalorder %s69, %s71
      %p78 = scmp.eq.s32.totalorder %s26, 3
      %p79 = por %p77, %p78
      %p80 = scmp.ne.s32.totalorder %s71, %s72
      %p81 = scmp.eq.s32.totalorder %s26, 0
      %p82 = por %p80, %p81
      %p83 = scmp.ne.s32.totalorder %s71, %s72
      %p84 = scmp.eq.s32.totalorder %s27, 3
      %p85 = por %p83, %p84
      %p87 = scmp.ne.s32.totalorder %s72, %s86
      %p88 = scmp.eq.s32.totalorder %s27, 0
      %p89 = por %p87, %p88
      %s90 = ssub.s32 %s28, %s40
      %s91 = ssub.s32 %s29, %s36
      %s92 = sor.u32 %s90, %s91
      %p93 = scmp.eq.s32.totalorder %s92, 0
      %s95 = sadd.s32 %s94, 1
      %s96 = scalar_select %p93, %s94, %s95
      %p99 = pneg %p93
      %p100 = scmp.eq.s32.totalorder %s21, 3
      %p101 = por %p99, %p100
      %p102 = scmp.ne.s32.totalorder %s94, %s97
      %p103 = scmp.eq.s32.totalorder %s21, 0
      %p104 = por %p102, %p103
      %p105 = scmp.ne.s32.totalorder %s94, %s97
      %p106 = scmp.eq.s32.totalorder %s26, 3
      %p107 = por %p105, %p106
      %p108 = scmp.ne.s32.totalorder %s97, %s98
      %p109 = scmp.eq.s32.totalorder %s26, 0
      %p110 = por %p108, %p109
      %p111 = scmp.ne.s32.totalorder %s97, %s98
      %p112 = scmp.eq.s32.totalorder %s27, 3
      %p113 = por %p111, %p112
      %p115 = scmp.ne.s32.totalorder %s98, %s114
      %p116 = scmp.eq.s32.totalorder %s27, 0
      %p117 = por %p115, %p116
      %s118 = ssub.s32 %s28, %s40
      %s119 = ssub.s32 %s29, %s36
      %s120 = sor.u32 %s118, %s119
      %p121 = scmp.eq.s32.totalorder %s120, 0
      %s123 = sadd.s32 %s122, 1
      %s124 = scalar_select %p121, %s122, %s123
      %p127 = pneg %p121
      %p128 = scmp.eq.s32.totalorder %s21, 3
      %p129 = por %p127, %p128
      %p130 = scmp.ne.s32.totalorder %s122, %s125
      %p131 = scmp.eq.s32.totalorder %s21, 0
      %p132 = por %p130, %p131
      %p133 = scmp.ne.s32.totalorder %s122, %s125
      %p134 = scmp.eq.s32.totalorder %s26, 3
      %p135 = por %p133, %p134
      %p136 = scmp.ne.s32.totalorder %s125, %s126
      %p137 = scmp.eq.s32.totalorder %s26, 0
      %p138 = por %p136, %p137
      %p139 = scmp.ne.s32.totalorder %s125, %s126
      %p140 = scmp.eq.s32.totalorder %s27, 3
      %p141 = por %p139, %p140
      %p143 = scmp.ne.s32.totalorder %s126, %s142
      %p144 = scmp.eq.s32.totalorder %s27, 0
      %p145 = por %p143, %p144
      %s146 = ssub.s32 %s28, %s40
      %s147 = ssub.s32 %s29, %s36
      %s148 = sor.u32 %s146, %s147
      %p149 = scmp.eq.s32.totalorder %s148, 0
      %s151 = sadd.s32 %s150, 1
      %s152 = scalar_select %p149, %s150, %s151
      %p155 = pneg %p149
      %p156 = scmp.eq.s32.totalorder %s21, 3
      %p157 = por %p155, %p156
      %p158 = scmp.ne.s32.totalorder %s150, %s153
      %p159 = scmp.eq.s32.totalorder %s21, 0
      %p160 = por %p158, %p159
      %p161 = scmp.ne.s32.totalorder %s150, %s153
      %p162 = scmp.eq.s32.totalorder %s26, 3
      %p163 = por %p161, %p162
      %p164 = scmp.ne.s32.totalorder %s153, %s154
      %p165 = scmp.eq.s32.totalorder %s26, 0
      %p166 = por %p164, %p165
      %p167 = scmp.ne.s32.totalorder %s153, %s154
      %p168 = scmp.eq.s32.totalorder %s27, 3
      %p169 = por %p167, %p168
      %p171 = scmp.ne.s32.totalorder %s154, %s170
      %p172 = scmp.eq.s32.totalorder %s27, 0
      %p173 = por %p171, %p172
      %p174 = scmp.le.s32.totalorder 1, %s21
      %p175 = scmp.lt.s32.totalorder %s21, 5
      %p176 = pnand %p174, %p175
      %p177 = pneg %p176
      // Predicated region
      $region9: #{tpu_custom_call.1} parent=5 // pred_check
        _
      $region10: #{tpu_custom_call.1} parent=5 // pred_check_branch
        %179 = sbr.rel (%p176) target = $region12
      $region11: #{tpu_custom_call.1} parent=5 // pred_region
        %s180 = ssub.s32 %s21, 1
        // Predicated region
        $region13: #{tpu_custom_call.1} parent=11 // pred_check
          %p181 = pneg %p82
        $region14: #{tpu_custom_call.1} parent=11 // pred_check_branch
          %183 = sbr.rel (%p181) target = $region16
        $region15: #{tpu_custom_call.1} parent=11 // pred_region
          %s185 = ssub.s32 3072, 3072
          %186 = vsyncadd [#allocation6], %s185
          %s187 = sshll.u32 [#allocation5], 4
          %s188 = int_to_ptr.vmem [resolvable:$true] %s187
          %193 = dma.hbm_to_vmem [thread:$0]  %s1, 3072, %s188, [#allocation6], 192, 192, 12
        $region16: #{tpu_custom_call.1} parent=11 // pred_fallthru
          _
      $region12: #{tpu_custom_call.1} parent=5 // pred_fallthru
        _
      %p194 = scmp.lt.s32.totalorder %s21, 4
      // Predicated region
      $region17: #{tpu_custom_call.1} parent=5 // pred_check
        %p195 = pneg %p194
      $region18: #{tpu_custom_call.1} parent=5 // pred_check_branch
        %197 = sbr.rel (%p195) target = $region20
      $region19: #{tpu_custom_call.1} parent=5 // pred_region
        // Predicated region
        $region21: #{tpu_custom_call.1} parent=19 // pred_check
          %p198 = pneg %p55
        $region22: #{tpu_custom_call.1} parent=19 // pred_check_branch
          %200 = sbr.rel (%p198) target = $region24
        $region23: #{tpu_custom_call.1} parent=19 // pred_region
          %s201 = sand.u32 %s45, 1
          %s202 = scalar_lea.sflag [#allocation3], %s201
          %s203 = sand.u32 %s45, 1
          %s204 = smul.addr %s203, 64
          %s205 = scalar_lea.vmem [#allocation2], %s204
          %s206 = smul.u32 16, %s29
          %s208 = ssub.s32 1024, 1024
          %209 = vsyncadd %s202, %s208
          %s210 = smul.addr %s28, 32
          %s211 = sadd.s32 %s206, %s210
          %s212 = smul.addr %s211, 64
          %s213 = scalar_lea.hbm %s0, %s212
          %s214 = sshll.u32 %s205, 4
          %s215 = int_to_ptr.vmem [resolvable:$true] %s214
          %220 = dma.hbm_to_vmem [thread:$0]  %s213, 1024, %s215, %s202, 64, 64, 4
        $region24: #{tpu_custom_call.1} parent=19 // pred_fallthru
          _
      $region20: #{tpu_custom_call.1} parent=5 // pred_fallthru
        _
      %p221 = scmp.le.s32.totalorder 1, %s21
      %p222 = scmp.lt.s32.totalorder %s21, 5
      %p223 = pnand %p221, %p222
      %p224 = pneg %p223
      // Predicated region
      $region25: #{tpu_custom_call.1} parent=5 // pred_check
        _
      $region26: #{tpu_custom_call.1} parent=5 // pred_check_branch
        %226 = sbr.rel (%p223) target = $region28
      $region27: #{tpu_custom_call.1} parent=5 // pred_region
        %s227 = ssub.s32 %s21, 1
        %s228 = sand.u32 %s48, 1
        %s229 = scalar_lea.sflag [#allocation3], %s228
        %s230 = sand.u32 %s48, 1
        %s231 = smul.addr %s230, 64
        %s232 = scalar_lea.vmem [#allocation2], %s231
        // Predicated region
        $region29: #{tpu_custom_call.1} parent=27 // pred_check
          %p233 = pneg %p61
        $region30: #{tpu_custom_call.1} parent=27 // pred_check_branch
          %235 = sbr.rel (%p233) target = $region32
        $region31: #{tpu_custom_call.1} parent=27 // pred_region
          %236 = dma.done %s229, 1024
        $region32: #{tpu_custom_call.1} parent=27 // pred_fallthru
          _
        // Predicated region
        $region33: #{tpu_custom_call.1} parent=27 // pred_check
          %p237 = pneg %p82
        $region34: #{tpu_custom_call.1} parent=27 // pred_check_branch
          %239 = sbr.rel (%p237) target = $region36
        $region35: #{tpu_custom_call.1} parent=27 // pred_region
          %240 = dma.done [#allocation6], 3072
        $region36: #{tpu_custom_call.1} parent=27 // pred_fallthru
          _
        %s241 = sand.u32 %s48, 1
        %s242 = scalar_lea.sflag [#allocation3], %s241
        %s243 = sand.u32 %s48, 1
        %s244 = smul.addr %s243, 64
        %s245 = scalar_lea.vmem [#allocation2], %s244
        %p246 = pneg %p61
        %p247 = pneg %p58
        %p248 = pneg %p82
        %p249 = pneg %p79
        %p250 = pneg %p110
        %p251 = pneg %p107
        %s252 = sand.u32 %s97, 1
        %s253 = scalar_lea.sflag [#allocation4], %s252
        %s254 = sand.u32 %s97, 1
        %s255 = smul.addr %s254, 64
        %s256 = scalar_lea.vmem [#allocation7], %s255
        %p257 = pneg %p138
        %p258 = pneg %p135
        %s259 = sand.u32 %s26, 1
        %s260 = scalar_lea.sflag [#allocation9], %s259
        %s261 = sand.u32 %s125, 1
        %s262 = smul.addr %s261, 64
        %s263 = scalar_lea.vmem [#allocation8], %s262
        %p264 = pneg %p166
        %p265 = pneg %p163
        %s266 = sand.u32 %s26, 1
        %s267 = scalar_lea.sflag [#allocation9], %s266
        %s268 = sand.u32 %s153, 1
        %s269 = smul.addr %s268, 64
        %s270 = scalar_lea.vmem [#allocation10], %s269
        %s271 = smul.u32 16, %s31
        %s272 = smul.u32 16, %s31
        %s273 = smul.u32 16, %s31
        %s274 = smul.u32 16, %s31
        %v276 = vld [vmem:[%s232] sm:$0xf]
        %v277 = vld [vmem:[%s232 + $0x4] sm:$0xf]
        %v278 = vld [vmem:[%s232 + $0x8] sm:$0xf]
        %v279 = vld [vmem:[%s232 + $0xc] sm:$0xf]
        %v280 = vld [vmem:[%s232 + $0x10] sm:$0xf]
        %v281 = vld [vmem:[%s232 + $0x14] sm:$0xf]
        %v282 = vld [vmem:[%s232 + $0x18] sm:$0xf]
        %v283 = vld [vmem:[%s232 + $0x1c] sm:$0xf]
        %v284 = vld [vmem:[%s232 + $0x20] sm:$0xf]
        %v285 = vld [vmem:[%s232 + $0x24] sm:$0xf]
        %v286 = vld [vmem:[%s232 + $0x28] sm:$0xf]
        %v287 = vld [vmem:[%s232 + $0x2c] sm:$0xf]
        %v288 = vld [vmem:[%s232 + $0x30] sm:$0xf]
        %v289 = vld [vmem:[%s232 + $0x34] sm:$0xf]
        %v290 = vld [vmem:[%s232 + $0x38] sm:$0xf]
        %v291 = vld [vmem:[%s232 + $0x3c] sm:$0xf]
        %v292 = vld [vmem:[#allocation5] sm:$0xff]
        %v293 = vld [vmem:[#allocation5 + $0x8] sm:$0xf]
        %v294 = vld [vmem:[#allocation5 + $0xc] sm:$0xff]
        %v295 = vld [vmem:[#allocation5 + $0x14] sm:$0xf]
        %v296 = vld [vmem:[#allocation5 + $0x18] sm:$0xff]
        %v297 = vld [vmem:[#allocation5 + $0x20] sm:$0xf]
        %v298 = vld [vmem:[#allocation5 + $0x24] sm:$0xff]
        %v299 = vld [vmem:[#allocation5 + $0x2c] sm:$0xf]
        %v300 = vld [vmem:[#allocation5 + $0x30] sm:$0xff]
        %v301 = vld [vmem:[#allocation5 + $0x38] sm:$0xf]
        %v302 = vld [vmem:[#allocation5 + $0x3c] sm:$0xff]
        %v303 = vld [vmem:[#allocation5 + $0x44] sm:$0xf]
        %v304 = vld [vmem:[#allocation5 + $0x48] sm:$0xff]
        %v305 = vld [vmem:[#allocation5 + $0x50] sm:$0xf]
        %v306 = vld [vmem:[#allocation5 + $0x54] sm:$0xff]
        %v307 = vld [vmem:[#allocation5 + $0x5c] sm:$0xf]
        %v308 = vld [vmem:[#allocation5 + $0x60] sm:$0xff]
        %v309 = vld [vmem:[#allocation5 + $0x68] sm:$0xf]
        %v310 = vld [vmem:[#allocation5 + $0x6c] sm:$0xff]
        %v311 = vld [vmem:[#allocation5 + $0x74] sm:$0xf]
        %v312 = vld [vmem:[#allocation5 + $0x78] sm:$0xff]
        %v313 = vld [vmem:[#allocation5 + $0x80] sm:$0xf]
        %v314 = vld [vmem:[#allocation5 + $0x84] sm:$0xff]
        %v315 = vld [vmem:[#allocation5 + $0x8c] sm:$0xf]
        %v316 = vld [vmem:[#allocation5 + $0x90] sm:$0xff]
        %v317 = vld [vmem:[#allocation5 + $0x98] sm:$0xf]
        %v318 = vld [vmem:[#allocation5 + $0x9c] sm:$0xff]
        %v319 = vld [vmem:[#allocation5 + $0xa4] sm:$0xf]
        %v320 = vld [vmem:[#allocation5 + $0xa8] sm:$0xff]
        %v321 = vld [vmem:[#allocation5 + $0xb0] sm:$0xf]
        %v322 = vld [vmem:[#allocation5 + $0xb4] sm:$0xff]
        %v323 = vld [vmem:[#allocation5 + $0xbc] sm:$0xf]
        %v340 = vunpack.c.l.b16 %v276
        %v341 = vunpack.c.l.b16 %v277
        %v342 = vunpack.c.l.b16 %v278
        %v343 = vunpack.c.l.b16 %v279
        %v344 = vunpack.c.l.b16 %v280
        %v345 = vunpack.c.l.b16 %v281
        %v346 = vunpack.c.l.b16 %v282
        %v347 = vunpack.c.l.b16 %v283
        %v348 = vunpack.c.l.b16 %v284
        %v349 = vunpack.c.l.b16 %v285
        %v350 = vunpack.c.l.b16 %v286
        %v351 = vunpack.c.l.b16 %v287
        %v352 = vunpack.c.l.b16 %v288
        %v353 = vunpack.c.l.b16 %v289
        %v354 = vunpack.c.l.b16 %v290
        %v355 = vunpack.c.l.b16 %v291
        %v356 = vpack.c.b16 %v341, %v340
        %v357 = vpack.c.b16 %v343, %v342
        %v358 = vpack.c.b16 %v345, %v344
        %v359 = vpack.c.b16 %v347, %v346
        %v360 = vpack.c.b16 %v349, %v348
        %v361 = vpack.c.b16 %v351, %v350
        %v362 = vpack.c.b16 %v353, %v352
        %v363 = vpack.c.b16 %v355, %v354
        %v404 = vunpack.c.l.b16 %v292
        %v405 = vunpack.c.h.b16 %v292
        %v406 = vunpack.c.l.b16 %v293
        %v407 = vunpack.c.l.b16 %v294
        %v408 = vunpack.c.h.b16 %v294
        %v409 = vunpack.c.l.b16 %v295
        %v410 = vunpack.c.l.b16 %v296
        %v411 = vunpack.c.h.b16 %v296
        %v412 = vunpack.c.l.b16 %v297
        %v413 = vunpack.c.l.b16 %v298
        %v414 = vunpack.c.h.b16 %v298
        %v415 = vunpack.c.l.b16 %v299
        %v416 = vunpack.c.l.b16 %v300
        %v417 = vunpack.c.h.b16 %v300
        %v418 = vunpack.c.l.b16 %v301
        %v419 = vunpack.c.l.b16 %v302
        %v420 = vunpack.c.h.b16 %v302
        %v421 = vunpack.c.l.b16 %v303
        %v422 = vunpack.c.l.b16 %v304
        %v423 = vunpack.c.h.b16 %v304
        %v424 = vunpack.c.l.b16 %v305
        %v425 = vunpack.c.l.b16 %v306
        %v426 = vunpack.c.h.b16 %v306
        %v427 = vunpack.c.l.b16 %v307
        %v428 = vunpack.c.l.b16 %v308
        %v429 = vunpack.c.h.b16 %v308
        %v430 = vunpack.c.l.b16 %v309
        %v431 = vunpack.c.l.b16 %v310
        %v432 = vunpack.c.h.b16 %v310
        %v433 = vunpack.c.l.b16 %v311
        %v434 = vunpack.c.l.b16 %v312
        %v435 = vunpack.c.h.b16 %v312
        %v436 = vunpack.c.l.b16 %v313
        %v437 = vunpack.c.l.b16 %v314
        %v438 = vunpack.c.h.b16 %v314
        %v439 = vunpack.c.l.b16 %v315
        %v440 = vunpack.c.l.b16 %v316
        %v441 = vunpack.c.h.b16 %v316
        %v442 = vunpack.c.l.b16 %v317
        %v443 = vunpack.c.l.b16 %v318
        %v444 = vunpack.c.h.b16 %v318
        %v445 = vunpack.c.l.b16 %v319
        %v446 = vunpack.c.l.b16 %v320
        %v447 = vunpack.c.h.b16 %v320
        %v448 = vunpack.c.l.b16 %v321
        %v449 = vunpack.c.l.b16 %v322
        %v450 = vunpack.c.h.b16 %v322
        %v451 = vunpack.c.l.b16 %v323
        %v452 = vpack.c.b16 %v407, %v404
        %v453 = vpack.c.b16 %v408, %v405
        %v454 = vpack.c.b16 %v409, %v406
        %v455 = vpack.c.b16 %v413, %v410
        %v456 = vpack.c.b16 %v414, %v411
        %v457 = vpack.c.b16 %v415, %v412
        %v458 = vpack.c.b16 %v419, %v416
        %v459 = vpack.c.b16 %v420, %v417
        %v460 = vpack.c.b16 %v421, %v418
        %v461 = vpack.c.b16 %v425, %v422
        %v462 = vpack.c.b16 %v426, %v423
        %v463 = vpack.c.b16 %v427, %v424
        %v464 = vpack.c.b16 %v431, %v428
        %v465 = vpack.c.b16 %v432, %v429
        %v466 = vpack.c.b16 %v433, %v430
        %v467 = vpack.c.b16 %v437, %v434
        %v468 = vpack.c.b16 %v438, %v435
        %v469 = vpack.c.b16 %v439, %v436
        %v470 = vpack.c.b16 %v443, %v440
        %v471 = vpack.c.b16 %v444, %v441
        %v472 = vpack.c.b16 %v445, %v442
        %v473 = vpack.c.b16 %v449, %v446
        %v474 = vpack.c.b16 %v450, %v447
        %v475 = vpack.c.b16 %v451, %v448
        %500 = vmatprep.subr.bf16.mxu0 %v474
        %501 = vmatpush1.bf16.msra.mxu0 %v473
        %502 = vmatprep.subr.bf16.mxu0 %v471
        %503 = vmatpush1.bf16.msra.mxu0 %v470
        %504 = vmatprep.subr.bf16.mxu0 %v468
        %505 = vmatpush1.bf16.msra.mxu0 %v467
        %506 = vmatprep.subr.bf16.mxu0 %v465
        %507 = vmatpush1.bf16.msra.mxu0 %v464
        %508 = vmatprep.subr.bf16.mxu0 %v462
        %509 = vmatpush1.bf16.msra.mxu0 %v461
        %510 = vmatprep.subr.bf16.mxu0 %v459
        %511 = vmatpush1.bf16.msra.mxu0 %v458
        %512 = vmatprep.subr.bf16.mxu0 %v456
        %513 = vmatpush1.bf16.msra.mxu0 %v455
        %514 = vmatprep.subr.bf16.mxu0 %v453
        %515 = vmatpush1.bf16.msra.mxu0 %v452
        %516 = vmatprep.subr.bf16.mxu0 0
        %517 = vmatpush2.bf16.msra.mxu0 0
        %518 = vmatprep.subr.bf16.mxu0 0
        %519 = vmatpush2.bf16.msra.mxu0 0
        %520 = vmatprep.subr.bf16.mxu0 0
        %521 = vmatpush2.bf16.msra.mxu0 0
        %522 = vmatprep.subr.bf16.mxu0 0
        %523 = vmatpush2.bf16.msra.mxu0 0
        %524 = vmatprep.subr.bf16.mxu0 0
        %525 = vmatpush2.bf16.msra.mxu0 0
        %526 = vmatprep.subr.bf16.mxu0 0
        %527 = vmatpush2.bf16.msra.mxu0 0
        %528 = vmatprep.subr.bf16.mxu0 0
        %529 = vmatpush2.bf16.msra.mxu0 0
        %530 = vmatprep.subr.bf16.mxu0 0
        %531 = vmatpush2.bf16.msra.mxu0 0
        %532 = vmatprep.mubr.bf16.mxu0 0
        %533 = vmatmul.mubr.bf16.gmra.mxu0 %v356
        %v534 = vpop.f32.mrf.mxu0
        %v535 = vadd.f32 0.0, %v534
        %v536 = vpop.f32.mrf.mxu0
        %v537 = vadd.f32 0.0, %v536
        %v538 = vpop.f32.mrf.mxu0
        %v539 = vadd.f32 0.0, %v538
        %v540 = vpop.f32.mrf.mxu0
        %v541 = vadd.f32 0.0, %v540
        %542 = vmatprep.mubr.bf16.mxu0 0
        %543 = vmatmul.mubr.bf16.gmra.mxu0 %v357
        %v544 = vpop.f32.mrf.mxu0
        %v545 = vadd.f32 0.0, %v544
        %v546 = vpop.f32.mrf.mxu0
        %v547 = vadd.f32 0.0, %v546
        %v548 = vpop.f32.mrf.mxu0
        %v549 = vadd.f32 0.0, %v548
        %v550 = vpop.f32.mrf.mxu0
        %v551 = vadd.f32 0.0, %v550
        %552 = vmatprep.mubr.bf16.mxu0 0
        %553 = vmatmul.mubr.bf16.gmra.mxu0 %v358
        %v554 = vpop.f32.mrf.mxu0
        %v555 = vadd.f32 0.0, %v554
        %v556 = vpop.f32.mrf.mxu0
        %v557 = vadd.f32 0.0, %v556
        %v558 = vpop.f32.mrf.mxu0
        %v559 = vadd.f32 0.0, %v558
        %v560 = vpop.f32.mrf.mxu0
        %v561 = vadd.f32 0.0, %v560
        %562 = vmatprep.mubr.bf16.mxu0 0
        %563 = vmatmul.mubr.bf16.gmra.mxu0 %v359
        %v564 = vpop.f32.mrf.mxu0
        %v565 = vadd.f32 0.0, %v564
        %v566 = vpop.f32.mrf.mxu0
        %v567 = vadd.f32 0.0, %v566
        %v568 = vpop.f32.mrf.mxu0
        %v569 = vadd.f32 0.0, %v568
        %v570 = vpop.f32.mrf.mxu0
        %v571 = vadd.f32 0.0, %v570
        %572 = vmatprep.mubr.bf16.mxu0 0
        %573 = vmatmul.mubr.bf16.gmra.mxu0 %v360
        %v574 = vpop.f32.mrf.mxu0
        %v575 = vadd.f32 0.0, %v574
        %v576 = vpop.f32.mrf.mxu0
        %v577 = vadd.f32 0.0, %v576
        %v578 = vpop.f32.mrf.mxu0
        %v579 = vadd.f32 0.0, %v578
        %v580 = vpop.f32.mrf.mxu0
        %v581 = vadd.f32 0.0, %v580
        %582 = vmatprep.mubr.bf16.mxu0 0
        %583 = vmatmul.mubr.bf16.gmra.mxu0 %v361
        %v584 = vpop.f32.mrf.mxu0
        %v585 = vadd.f32 0.0, %v584
        %v586 = vpop.f32.mrf.mxu0
        %v587 = vadd.f32 0.0, %v586
        %v588 = vpop.f32.mrf.mxu0
        %v589 = vadd.f32 0.0, %v588
        %v590 = vpop.f32.mrf.mxu0
        %v591 = vadd.f32 0.0, %v590
        %592 = vmatprep.mubr.bf16.mxu0 0
        %593 = vmatmul.mubr.bf16.gmra.mxu0 %v362
        %v594 = vpop.f32.mrf.mxu0
        %v595 = vadd.f32 0.0, %v594
        %v596 = vpop.f32.mrf.mxu0
        %v597 = vadd.f32 0.0, %v596
        %v598 = vpop.f32.mrf.mxu0
        %v599 = vadd.f32 0.0, %v598
        %v600 = vpop.f32.mrf.mxu0
        %v601 = vadd.f32 0.0, %v600
        %602 = vmatprep.mubr.bf16.mxu0 0
        %603 = vmatmul.mubr.bf16.gmra.mxu0 %v363
        %v604 = vpop.f32.mrf.mxu0
        %v605 = vadd.f32 0.0, %v604
        %v606 = vpop.f32.mrf.mxu0
        %v607 = vadd.f32 0.0, %v606
        %v608 = vpop.f32.mrf.mxu0
        %v609 = vadd.f32 0.0, %v608
        %v610 = vpop.f32.mrf.mxu0
        %v611 = vadd.f32 0.0, %v610
        %612 = vdwg.mxu0
        %613 = vmatprep.subr.bf16.mxu0 0
        %614 = vmatpush1.bf16.msra.mxu0 %v475
        %615 = vmatprep.subr.bf16.mxu0 0
        %616 = vmatpush1.bf16.msra.mxu0 %v472
        %617 = vmatprep.subr.bf16.mxu0 0
        %618 = vmatpush1.bf16.msra.mxu0 %v469
        %619 = vmatprep.subr.bf16.mxu0 0
        %620 = vmatpush1.bf16.msra.mxu0 %v466
        %621 = vmatprep.subr.bf16.mxu0 0
        %622 = vmatpush1.bf16.msra.mxu0 %v463
        %623 = vmatprep.subr.bf16.mxu0 0
        %624 = vmatpush1.bf16.msra.mxu0 %v460
        %625 = vmatprep.subr.bf16.mxu0 0
        %626 = vmatpush1.bf16.msra.mxu0 %v457
        %627 = vmatprep.subr.bf16.mxu0 0
        %628 = vmatpush1.bf16.msra.mxu0 %v454
        %629 = vmatprep.subr.bf16.mxu0 0
        %630 = vmatpush2.bf16.msra.mxu0 0
        %631 = vmatprep.subr.bf16.mxu0 0
        %632 = vmatpush2.bf16.msra.mxu0 0
        %633 = vmatprep.subr.bf16.mxu0 0
        %634 = vmatpush2.bf16.msra.mxu0 0
        %635 = vmatprep.subr.bf16.mxu0 0
        %636 = vmatpush2.bf16.msra.mxu0 0
        %637 = vmatprep.subr.bf16.mxu0 0
        %638 = vmatpush2.bf16.msra.mxu0 0
        %639 = vmatprep.subr.bf16.mxu0 0
        %640 = vmatpush2.bf16.msra.mxu0 0
        %641 = vmatprep.subr.bf16.mxu0 0
        %642 = vmatpush2.bf16.msra.mxu0 0
        %643 = vmatprep.subr.bf16.mxu0 0
        %644 = vmatpush2.bf16.msra.mxu0 0
        %645 = vmatprep.mubr.bf16.mxu0 0
        %646 = vmatmul.mubr.bf16.gmra.mxu0 %v356
        %v647 = vpop.f32.mrf.mxu0
        %v648 = vadd.f32 0.0, %v647
        %v649 = vpop.f32.mrf.mxu0
        %v650 = vpop.f32.mrf.mxu0
        %v651 = vadd.f32 0.0, %v650
        %v652 = vpop.f32.mrf.mxu0
        %653 = vmatprep.mubr.bf16.mxu0 0
        %654 = vmatmul.mubr.bf16.gmra.mxu0 %v357
        %v655 = vpop.f32.mrf.mxu0
        %v656 = vadd.f32 0.0, %v655
        %v657 = vpop.f32.mrf.mxu0
        %v658 = vpop.f32.mrf.mxu0
        %v659 = vadd.f32 0.0, %v658
        %v660 = vpop.f32.mrf.mxu0
        %661 = vmatprep.mubr.bf16.mxu0 0
        %662 = vmatmul.mubr.bf16.gmra.mxu0 %v358
        %v663 = vpop.f32.mrf.mxu0
        %v664 = vadd.f32 0.0, %v663
        %v665 = vpop.f32.mrf.mxu0
        %v666 = vpop.f32.mrf.mxu0
        %v667 = vadd.f32 0.0, %v666
        %v668 = vpop.f32.mrf.mxu0
        %669 = vmatprep.mubr.bf16.mxu0 0
        %670 = vmatmul.mubr.bf16.gmra.mxu0 %v359
        %v671 = vpop.f32.mrf.mxu0
        %v672 = vadd.f32 0.0, %v671
        %v673 = vpop.f32.mrf.mxu0
        %v674 = vpop.f32.mrf.mxu0
        %v675 = vadd.f32 0.0, %v674
        %v676 = vpop.f32.mrf.mxu0
        %677 = vmatprep.mubr.bf16.mxu0 0
        %678 = vmatmul.mubr.bf16.gmra.mxu0 %v360
        %v679 = vpop.f32.mrf.mxu0
        %v680 = vadd.f32 0.0, %v679
        %v681 = vpop.f32.mrf.mxu0
        %v682 = vpop.f32.mrf.mxu0
        %v683 = vadd.f32 0.0, %v682
        %v684 = vpop.f32.mrf.mxu0
        %685 = vmatprep.mubr.bf16.mxu0 0
        %686 = vmatmul.mubr.bf16.gmra.mxu0 %v361
        %v687 = vpop.f32.mrf.mxu0
        %v688 = vadd.f32 0.0, %v687
        %v689 = vpop.f32.mrf.mxu0
        %v690 = vpop.f32.mrf.mxu0
        %v691 = vadd.f32 0.0, %v690
        %v692 = vpop.f32.mrf.mxu0
        %693 = vmatprep.mubr.bf16.mxu0 0
        %694 = vmatmul.mubr.bf16.gmra.mxu0 %v362
        %v695 = vpop.f32.mrf.mxu0
        %v696 = vadd.f32 0.0, %v695
        %v697 = vpop.f32.mrf.mxu0
        %v698 = vpop.f32.mrf.mxu0
        %v699 = vadd.f32 0.0, %v698
        %v700 = vpop.f32.mrf.mxu0
        %701 = vmatprep.mubr.bf16.mxu0 0
        %702 = vmatmul.mubr.bf16.gmra.mxu0 %v363
        %v703 = vpop.f32.mrf.mxu0
        %v704 = vadd.f32 0.0, %v703
        %v705 = vpop.f32.mrf.mxu0
        %v706 = vpop.f32.mrf.mxu0
        %v707 = vadd.f32 0.0, %v706
        %v708 = vpop.f32.mrf.mxu0
        %709 = vdwg.mxu0
        %v710 = vpack.c.bf16 %v539, %v535
        %v711 = vpack.c.bf16 %v549, %v545
        %v712 = vpack.c.bf16 %v559, %v555
        %v713 = vpack.c.bf16 %v569, %v565
        %v714 = vpack.c.bf16 %v579, %v575
        %v715 = vpack.c.bf16 %v589, %v585
        %v716 = vpack.c.bf16 %v599, %v595
        %v717 = vpack.c.bf16 %v609, %v605
        %v726 = vunpack.c.l.b16 %v710
        %v727 = vunpack.c.h.b16 %v710
        %v728 = vunpack.c.l.b16 %v711
        %v729 = vunpack.c.h.b16 %v711
        %v730 = vunpack.c.l.b16 %v712
        %v731 = vunpack.c.h.b16 %v712
        %v732 = vunpack.c.l.b16 %v713
        %v733 = vunpack.c.h.b16 %v713
        %v734 = vunpack.c.l.b16 %v714
        %v735 = vunpack.c.h.b16 %v714
        %v736 = vunpack.c.l.b16 %v715
        %v737 = vunpack.c.h.b16 %v715
        %v738 = vunpack.c.l.b16 %v716
        %v739 = vunpack.c.h.b16 %v716
        %v740 = vunpack.c.l.b16 %v717
        %v741 = vunpack.c.h.b16 %v717
        %v742 = vpack.c.b16 %v726, %v726
        %v743 = vpack.c.b16 %v727, %v727
        %v744 = vpack.c.b16 %v728, %v728
        %v745 = vpack.c.b16 %v729, %v729
        %v746 = vpack.c.b16 %v730, %v730
        %v747 = vpack.c.b16 %v731, %v731
        %v748 = vpack.c.b16 %v732, %v732
        %v749 = vpack.c.b16 %v733, %v733
        %v750 = vpack.c.b16 %v734, %v734
        %v751 = vpack.c.b16 %v735, %v735
        %v752 = vpack.c.b16 %v736, %v736
        %v753 = vpack.c.b16 %v737, %v737
        %v754 = vpack.c.b16 %v738, %v738
        %v755 = vpack.c.b16 %v739, %v739
        %v756 = vpack.c.b16 %v740, %v740
        %v757 = vpack.c.b16 %v741, %v741
        %774 = vst [vmem:[%s256] sm:$0xf] %v742
        %775 = vst [vmem:[%s256 + $0x4] sm:$0xf] %v743
        %776 = vst [vmem:[%s256 + $0x8] sm:$0xf] %v744
        %777 = vst [vmem:[%s256 + $0xc] sm:$0xf] %v745
        %778 = vst [vmem:[%s256 + $0x10] sm:$0xf] %v746
        %779 = vst [vmem:[%s256 + $0x14] sm:$0xf] %v747
        %780 = vst [vmem:[%s256 + $0x18] sm:$0xf] %v748
        %781 = vst [vmem:[%s256 + $0x1c] sm:$0xf] %v749
        %782 = vst [vmem:[%s256 + $0x20] sm:$0xf] %v750
        %783 = vst [vmem:[%s256 + $0x24] sm:$0xf] %v751
        %784 = vst [vmem:[%s256 + $0x28] sm:$0xf] %v752
        %785 = vst [vmem:[%s256 + $0x2c] sm:$0xf] %v753
        %786 = vst [vmem:[%s256 + $0x30] sm:$0xf] %v754
        %787 = vst [vmem:[%s256 + $0x34] sm:$0xf] %v755
        %788 = vst [vmem:[%s256 + $0x38] sm:$0xf] %v756
        %789 = vst [vmem:[%s256 + $0x3c] sm:$0xf] %v757
        %v790 = vpack.c.bf16 %v541, %v537
        %v791 = vpack.c.bf16 %v551, %v547
        %v792 = vpack.c.bf16 %v561, %v557
        %v793 = vpack.c.bf16 %v571, %v567
        %v794 = vpack.c.bf16 %v581, %v577
        %v795 = vpack.c.bf16 %v591, %v587
        %v796 = vpack.c.bf16 %v601, %v597
        %v797 = vpack.c.bf16 %v611, %v607
        %v806 = vunpack.c.l.b16 %v790
        %v807 = vunpack.c.h.b16 %v790
        %v808 = vunpack.c.l.b16 %v791
        %v809 = vunpack.c.h.b16 %v791
        %v810 = vunpack.c.l.b16 %v792
        %v811 = vunpack.c.h.b16 %v792
        %v812 = vunpack.c.l.b16 %v793
        %v813 = vunpack.c.h.b16 %v793
        %v814 = vunpack.c.l.b16 %v794
        %v815 = vunpack.c.h.b16 %v794
        %v816 = vunpack.c.l.b16 %v795
        %v817 = vunpack.c.h.b16 %v795
        %v818 = vunpack.c.l.b16 %v796
        %v819 = vunpack.c.h.b16 %v796
        %v820 = vunpack.c.l.b16 %v797
        %v821 = vunpack.c.h.b16 %v797
        %v822 = vpack.c.b16 %v806, %v806
        %v823 = vpack.c.b16 %v807, %v807
        %v824 = vpack.c.b16 %v808, %v808
        %v825 = vpack.c.b16 %v809, %v809
        %v826 = vpack.c.b16 %v810, %v810
        %v827 = vpack.c.b16 %v811, %v811
        %v828 = vpack.c.b16 %v812, %v812
        %v829 = vpack.c.b16 %v813, %v813
        %v830 = vpack.c.b16 %v814, %v814
        %v831 = vpack.c.b16 %v815, %v815
        %v832 = vpack.c.b16 %v816, %v816
        %v833 = vpack.c.b16 %v817, %v817
        %v834 = vpack.c.b16 %v818, %v818
        %v835 = vpack.c.b16 %v819, %v819
        %v836 = vpack.c.b16 %v820, %v820
        %v837 = vpack.c.b16 %v821, %v821
        %854 = vst [vmem:[%s263] sm:$0xf] %v822
        %855 = vst [vmem:[%s263 + $0x4] sm:$0xf] %v823
        %856 = vst [vmem:[%s263 + $0x8] sm:$0xf] %v824
        %857 = vst [vmem:[%s263 + $0xc] sm:$0xf] %v825
        %858 = vst [vmem:[%s263 + $0x10] sm:$0xf] %v826
        %859 = vst [vmem:[%s263 + $0x14] sm:$0xf] %v827
        %860 = vst [vmem:[%s263 + $0x18] sm:$0xf] %v828
        %861 = vst [vmem:[%s263 + $0x1c] sm:$0xf] %v829
        %862 = vst [vmem:[%s263 + $0x20] sm:$0xf] %v830
        %863 = vst [vmem:[%s263 + $0x24] sm:$0xf] %v831
        %864 = vst [vmem:[%s263 + $0x28] sm:$0xf] %v832
        %865 = vst [vmem:[%s263 + $0x2c] sm:$0xf] %v833
        %866 = vst [vmem:[%s263 + $0x30] sm:$0xf] %v834
        %867 = vst [vmem:[%s263 + $0x34] sm:$0xf] %v835
        %868 = vst [vmem:[%s263 + $0x38] sm:$0xf] %v836
        %869 = vst [vmem:[%s263 + $0x3c] sm:$0xf] %v837
        %v870 = vpack.c.bf16 %v651, %v648
        %v871 = vpack.c.bf16 %v659, %v656
        %v872 = vpack.c.bf16 %v667, %v664
        %v873 = vpack.c.bf16 %v675, %v672
        %v874 = vpack.c.bf16 %v683, %v680
        %v875 = vpack.c.bf16 %v691, %v688
        %v876 = vpack.c.bf16 %v699, %v696
        %v877 = vpack.c.bf16 %v707, %v704
        %v886 = vunpack.c.l.b16 %v870
        %v887 = vunpack.c.h.b16 %v870
        %v888 = vunpack.c.l.b16 %v871
        %v889 = vunpack.c.h.b16 %v871
        %v890 = vunpack.c.l.b16 %v872
        %v891 = vunpack.c.h.b16 %v872
        %v892 = vunpack.c.l.b16 %v873
        %v893 = vunpack.c.h.b16 %v873
        %v894 = vunpack.c.l.b16 %v874
        %v895 = vunpack.c.h.b16 %v874
        %v896 = vunpack.c.l.b16 %v875
        %v897 = vunpack.c.h.b16 %v875
        %v898 = vunpack.c.l.b16 %v876
        %v899 = vunpack.c.h.b16 %v876
        %v900 = vunpack.c.l.b16 %v877
        %v901 = vunpack.c.h.b16 %v877
        %v902 = vpack.c.b16 %v886, %v886
        %v903 = vpack.c.b16 %v887, %v887
        %v904 = vpack.c.b16 %v888, %v888
        %v905 = vpack.c.b16 %v889, %v889
        %v906 = vpack.c.b16 %v890, %v890
        %v907 = vpack.c.b16 %v891, %v891
        %v908 = vpack.c.b16 %v892, %v892
        %v909 = vpack.c.b16 %v893, %v893
        %v910 = vpack.c.b16 %v894, %v894
        %v911 = vpack.c.b16 %v895, %v895
        %v912 = vpack.c.b16 %v896, %v896
        %v913 = vpack.c.b16 %v897, %v897
        %v914 = vpack.c.b16 %v898, %v898
        %v915 = vpack.c.b16 %v899, %v899
        %v916 = vpack.c.b16 %v900, %v900
        %v917 = vpack.c.b16 %v901, %v901
        %934 = vst [vmem:[%s270] sm:$0xf] %v902
        %935 = vst [vmem:[%s270 + $0x4] sm:$0xf] %v903
        %936 = vst [vmem:[%s270 + $0x8] sm:$0xf] %v904
        %937 = vst [vmem:[%s270 + $0xc] sm:$0xf] %v905
        %938 = vst [vmem:[%s270 + $0x10] sm:$0xf] %v906
        %939 = vst [vmem:[%s270 + $0x14] sm:$0xf] %v907
        %940 = vst [vmem:[%s270 + $0x18] sm:$0xf] %v908
        %941 = vst [vmem:[%s270 + $0x1c] sm:$0xf] %v909
        %942 = vst [vmem:[%s270 + $0x20] sm:$0xf] %v910
        %943 = vst [vmem:[%s270 + $0x24] sm:$0xf] %v911
        %944 = vst [vmem:[%s270 + $0x28] sm:$0xf] %v912
        %945 = vst [vmem:[%s270 + $0x2c] sm:$0xf] %v913
        %946 = vst [vmem:[%s270 + $0x30] sm:$0xf] %v914
        %947 = vst [vmem:[%s270 + $0x34] sm:$0xf] %v915
        %948 = vst [vmem:[%s270 + $0x38] sm:$0xf] %v916
        %949 = vst [vmem:[%s270 + $0x3c] sm:$0xf] %v917
        %s950 = sand.u32 %s97, 1
        %s951 = scalar_lea.sflag [#allocation4], %s950
        %s952 = sand.u32 %s97, 1
        %s953 = smul.addr %s952, 64
        %s954 = scalar_lea.vmem [#allocation7], %s953
        %s955 = sand.u32 %s26, 1
        %s956 = scalar_lea.sflag [#allocation9], %s955
        %s957 = sand.u32 %s125, 1
        %s958 = smul.addr %s957, 64
        %s959 = scalar_lea.vmem [#allocation8], %s958
        %s960 = sand.u32 %s26, 1
        %s961 = scalar_lea.sflag [#allocation9], %s960
        %s962 = sand.u32 %s153, 1
        %s963 = smul.addr %s962, 64
        %s964 = scalar_lea.vmem [#allocation10], %s963
        // Predicated region
        $region37: #{tpu_custom_call.1} parent=27 // pred_check
          %p965 = pneg %p107
        $region38: #{tpu_custom_call.1} parent=27 // pred_check_branch
          %967 = sbr.rel (%p965) target = $region40
        $region39: #{tpu_custom_call.1} parent=27 // pred_region
          %s968 = smul.u32 16, %s31
          %s970 = ssub.s32 1024, 1024
          %971 = vsyncadd %s951, %s970
          %s972 = smul.addr %s30, 32
          %s973 = sadd.s32 %s968, %s972
          %s974 = smul.addr %s973, 64
          %s975 = scalar_lea.hbm %s2, %s974
          %s976 = sshll.u32 %s954, 4
          %s977 = int_to_ptr.vmem [resolvable:$true] %s976
          %982 = dma.vmem_to_hbm [thread:$0]  %s977, 1024, %s975, %s951, 64, 64, 4
        $region40: #{tpu_custom_call.1} parent=27 // pred_fallthru
          _
        // Predicated region
        $region41: #{tpu_custom_call.1} parent=27 // pred_check
          %p983 = pneg %p135
        $region42: #{tpu_custom_call.1} parent=27 // pred_check_branch
          %985 = sbr.rel (%p983) target = $region44
        $region43: #{tpu_custom_call.1} parent=27 // pred_region
          %s986 = smul.u32 16, %s31
          %s988 = ssub.s32 1024, 1024
          %989 = vsyncadd %s956, %s988
          %s990 = smul.addr %s30, 32
          %s991 = sadd.s32 %s986, %s990
          %s992 = smul.addr %s991, 64
          %s993 = scalar_lea.hbm %s3, %s992
          %s994 = sshll.u32 %s959, 4
          %s995 = int_to_ptr.vmem [resolvable:$true] %s994
          %1000 = dma.vmem_to_hbm [thread:$0]  %s995, 1024, %s993, %s956, 64, 64, 4
        $region44: #{tpu_custom_call.1} parent=27 // pred_fallthru
          _
        // Predicated region
        $region45: #{tpu_custom_call.1} parent=27 // pred_check
          %p1001 = pneg %p163
        $region46: #{tpu_custom_call.1} parent=27 // pred_check_branch
          %1003 = sbr.rel (%p1001) target = $region48
        $region47: #{tpu_custom_call.1} parent=27 // pred_region
          %s1004 = smul.u32 16, %s31
          %s1006 = ssub.s32 1024, 1024
          %1007 = vsyncadd %s961, %s1006
          %s1008 = smul.addr %s30, 32
          %s1009 = sadd.s32 %s1004, %s1008
          %s1010 = smul.addr %s1009, 64
          %s1011 = scalar_lea.hbm %s4, %s1010
          %s1012 = sshll.u32 %s964, 4
          %s1013 = int_to_ptr.vmem [resolvable:$true] %s1012
          %1018 = dma.vmem_to_hbm [thread:$0]  %s1013, 1024, %s1011, %s961, 64, 64, 4
        $region48: #{tpu_custom_call.1} parent=27 // pred_fallthru
          _
      $region28: #{tpu_custom_call.1} parent=5 // pred_fallthru
        _
      %p1019 = scmp.le.s32.totalorder 2, %s21
      // Predicated region
      $region49: #{tpu_custom_call.1} parent=5 // pred_check
        %p1020 = pneg %p1019
      $region50: #{tpu_custom_call.1} parent=5 // pred_check_branch
        %1022 = sbr.rel (%p1020) target = $region52
      $region51: #{tpu_custom_call.1} parent=5 // pred_region
        %s1023 = ssub.s32 %s21, 2
        // Predicated region
        $region53: #{tpu_custom_call.1} parent=51 // pred_check
          %p1024 = pneg %p113
        $region54: #{tpu_custom_call.1} parent=51 // pred_check_branch
          %1026 = sbr.rel (%p1024) target = $region56
        $region55: #{tpu_custom_call.1} parent=51 // pred_region
          %s1027 = sand.u32 %s98, 1
          %s1028 = scalar_lea.sflag [#allocation4], %s1027
          %s1029 = sand.u32 %s98, 1
          %s1030 = smul.addr %s1029, 64
          %s1031 = scalar_lea.vmem [#allocation7], %s1030
          %1032 = dma.done %s1028, 1024
        $region56: #{tpu_custom_call.1} parent=51 // pred_fallthru
          _
        // Predicated region
        $region57: #{tpu_custom_call.1} parent=51 // pred_check
          %p1033 = pneg %p141
        $region58: #{tpu_custom_call.1} parent=51 // pred_check_branch
          %1035 = sbr.rel (%p1033) target = $region60
        $region59: #{tpu_custom_call.1} parent=51 // pred_region
          %s1036 = sand.u32 %s27, 1
          %s1037 = scalar_lea.sflag [#allocation9], %s1036
          %s1038 = sand.u32 %s126, 1
          %s1039 = smul.addr %s1038, 64
          %s1040 = scalar_lea.vmem [#allocation8], %s1039
          %1041 = dma.done %s1037, 1024
        $region60: #{tpu_custom_call.1} parent=51 // pred_fallthru
          _
        // Predicated region
        $region61: #{tpu_custom_call.1} parent=51 // pred_check
          %p1042 = pneg %p169
        $region62: #{tpu_custom_call.1} parent=51 // pred_check_branch
          %1044 = sbr.rel (%p1042) target = $region64
        $region63: #{tpu_custom_call.1} parent=51 // pred_region
          %s1045 = sand.u32 %s27, 1
          %s1046 = scalar_lea.sflag [#allocation9], %s1045
          %s1047 = sand.u32 %s154, 1
          %s1048 = smul.addr %s1047, 64
          %s1049 = scalar_lea.vmem [#allocation10], %s1048
          %1050 = dma.done %s1046, 1024
        $region64: #{tpu_custom_call.1} parent=51 // pred_fallthru
          _
      $region52: #{tpu_custom_call.1} parent=5 // pred_fallthru
        _
    $region6: #{tpu_custom_call.1} parent=1 // loop_footer
      %s25 = sadd.s32 1, %s21
    $region7: #{tpu_custom_call.1} parent=1 // loop_footer_branch
      %20 = sbr.rel target = $region3
    $region8: #{tpu_custom_call.1} parent=1 // loop_exit
      _
    %1051 = vsyncpa [#allocation3], 1
    %s1052 = scalar_lea.sflag [#allocation3], 1
    %1053 = vsyncpa %s1052, 1
    %1054 = vsyncpa [#allocation6], 1
    %1055 = vsyncpa [#allocation4], 1
    %s1056 = scalar_lea.sflag [#allocation4], 1
    %1057 = vsyncpa %s1056, 1
    %1058 = vsyncpa [#allocation9], 1
    %s1059 = scalar_lea.sflag [#allocation9], 1
    %1060 = vsyncpa %s1059, 1

</llo_original>
